<compile_context>
chip_gen: v6e
topology: v6e:2x2x1
jax: 0.10.0
libtpu: 0.0.40
codegen_flags: <defaults>
</compile_context>

<pallas_src>
import functools

import jax
import jax.numpy as jnp
from jax.experimental import pallas as pl
from jax.experimental.pallas import tpu as pltpu


def _lista_kernel(theta_ref, we_ref, g_ref, x_ref, s_ref, *, T):
    """One lane-block of LISTA (batch folded into the lane axis).

    theta_ref: SMEM (1,)   f32   scalar soft-threshold
    we_ref:    VMEM (N, M) bf16  shared across all T steps
    g_ref:     VMEM (N, N) bf16  shared across all T steps
    x_ref:     VMEM (M, L) bf16  lane-block of folded / padded X
    s_ref:     VMEM (N, L) f32   lane-block of the output sparse codes
    """
    theta = theta_ref[0]                       # f32 scalar, splatted by compiler
    we = we_ref[...]                           # bf16
    g = g_ref[...]                             # bf16
    x = x_ref[...]                             # bf16

    # We @ X is constant across the T iterations (We shared) -> hoist it.
    # bf16 MXU operands, f32 accumulation.
    p1 = jnp.dot(we, x, preferred_element_type=jnp.float32)          # (N, L) f32

    # S_0 = 0  =>  G @ S_0 = 0, so step 0 is soft_threshold(p1).
    # soft_threshold(z, t) == z - clip(z, -t, t)   (3-op clamp form, f32 VPU).
    s = p1 - jnp.clip(p1, -theta, theta)

    # Statically unroll the remaining T-1 dependent steps (T compile-time const)
    # so the scheduler can overlap soft-threshold VPU work with MXU push/drain.
    for _ in range(T - 1):
        z = p1 + jnp.dot(g, s.astype(jnp.bfloat16),
                         preferred_element_type=jnp.float32)
        s = z - jnp.clip(z, -theta, theta)

    s_ref[...] = s


def lista_forward(X, We, G, theta, *, T):
    """X: (B, M, K) float32 -> S: (B, N, K) float32.

    The batch is folded into the lane axis and zero-padded to a multiple of
    128 lanes; lane blocks are independent across the T-step recurrence, so the
    lane axis is tiled with a "parallel" grid (useful on v7x megacore once
    B*K >= 256).  Padded lane columns stay identically zero (soft_threshold(0)
    == 0) and are sliced off afterwards.
    """
    B, M, K = X.shape
    N = We.shape[0]
    assert We.shape == (N, M)
    assert G.shape == (N, N)
    assert T >= 1

    Lb = B * K
    Lpad = ((Lb + 127) // 128) * 128

    # Lane tile: single block at 128 lanes; 128-lane blocks (>=2 of them) once
    # the problem is big enough that a v7x core split pays off.
    laneT = Lpad if Lpad < 256 else 128
    n_blocks = Lpad // laneT

    # (B, M, K) -> (M, B*K) -> zero-pad lanes to Lpad; bf16 MXU operand.
    # (Wrapper-side fold is fine at these sizes; fold via BlockSpec/index_map
    #  instead if B*K is scaled up a lot.)
    Xf = jnp.transpose(X, (1, 0, 2)).reshape(M, Lb)
    Xp = jnp.pad(Xf, ((0, 0), (0, Lpad - Lb))).astype(jnp.bfloat16)

    theta_arr = jnp.asarray(theta, jnp.float32).reshape(1)

    kernel = functools.partial(_lista_kernel, T=T)

    # Advisory cost for XLA's scheduler.
    flops = 2 * N * M * Lpad + (T - 1) * 2 * N * N * Lpad + 3 * T * N * Lpad
    bytes_accessed = 2 * (M * Lpad + N * M + N * N) + 4 * N * Lpad

    Sp = pl.pallas_call(
        kernel,
        out_shape=jax.ShapeDtypeStruct((N, Lpad), jnp.float32),
        grid=(n_blocks,),
        in_specs=[
            pl.BlockSpec(memory_space=pltpu.SMEM),              # theta scalar
            pl.BlockSpec((N, M), lambda j: (0, 0)),             # We (shared)
            pl.BlockSpec((N, N), lambda j: (0, 0)),             # G  (shared)
            pl.BlockSpec((M, laneT), lambda j: (0, j)),         # folded X block
        ],
        out_specs=pl.BlockSpec((N, laneT), lambda j: (0, j)),   # folded S block
        compiler_params=pltpu.CompilerParams(
            dimension_semantics=("parallel",),
        ),
        cost_estimate=pl.CostEstimate(
            flops=flops, transcendentals=0, bytes_accessed=bytes_accessed),
    )(theta_arr, We.astype(jnp.bfloat16), G.astype(jnp.bfloat16), Xp)

    # Undo the lane folding: (N, Lpad) -> (N, B*K) -> (B, N, K).
    return Sp[:, :Lb].reshape(N, B, K).transpose(1, 0, 2)


def lista_reference(X, We, G, theta, *, T):
    """Plain-JAX f32 reference mirroring the PyTorch forward."""
    B, M, K = X.shape
    N = We.shape[0]
    S = jnp.zeros((B, N, K), jnp.float32)

    def soft(x, thr):
        zero = jnp.zeros_like(x)
        return jnp.maximum(zero, x - thr) + jnp.minimum(zero, x + thr)

    p1 = jnp.einsum("nm,bmk->bnk", We, X)
    for _ in range(T):
        p2 = jnp.einsum("np,bpk->bnk", G, S)
        S = soft(p1 + p2, theta)
    return S


if __name__ == "__main__":
    key = jax.random.PRNGKey(0)
    k_a, k_x = jax.random.split(key)

    # Module hyper-params (small, consistent with LISTA.__init__ / forward).
    # B*K = 128 fills the 128-lane axis exactly (review: lane filling is free).
    T = 16
    alpha = 5.0
    B, M, N, K = 8, 8, 32, 16          # X: (B, M, K), dictionary A[0]: (M, N)

    # Deterministic synthetic dictionary A[0] with shape (M, N).
    A0 = jax.random.normal(k_a, (M, N), jnp.float32) / jnp.sqrt(M)

    # Parameter setup exactly as in __init__ (plain JAX glue).
    L = 1.001 * jnp.linalg.norm(A0, ord=2) ** 2
    theta = alpha / L                                     # scalar (shared)
    We = A0.T / L                                         # (N, M) (shared)
    G = jnp.eye(N, dtype=jnp.float32) - (A0.T / L) @ A0   # (N, N) (shared)

    # Scale X so a meaningful fraction of codes is non-zero after thresholding.
    X = 4.0 * jax.random.normal(k_x, (B, M, K), jnp.float32)

    S = lista_forward(X, We, G, theta, T=T)
    S = jax.block_until_ready(S)

    S_ref = lista_reference(X, We, G, theta, T=T)
    assert S.shape == (B, N, K)
    # bf16 MXU operands over a 16-step recurrence (f32 accumulation): documented
    # tolerance ~5e-2 vs the pure-f32 reference.
    assert jnp.allclose(S, S_ref, atol=5e-2, rtol=5e-2), "mismatch vs reference"

    print("KERNEL_OK")
</pallas_src>

<mosaic_0001>
module attributes {stable_mosaic.version = 11 : i64} {
  func.func @_lista_kernel(%arg0: i32, %arg1: memref<1xf32, #tpu.memory_space<smem>>, %arg2: memref<32x8xbf16, #tpu.memory_space<vmem>>, %arg3: memref<32x32xbf16, #tpu.memory_space<vmem>>, %arg4: memref<8x128xbf16, #tpu.memory_space<vmem>>, %arg5: memref<32x128xf32, #tpu.memory_space<vmem>>) attributes {dimension_semantics = [#tpu.dimension_semantics<parallel>], iteration_bounds = array<i64: 1>, scalar_prefetch = 0 : i64, scratch_operands = 0 : i64, tpu.core_type = #tpu.core_type<tc>, window_params = [{transform_indices = @transform_0, window_bounds = array<i64: 1>}, {pipeline_mode = #tpu.pipeline_mode<synchronous>, transform_indices = @transform_1, window_bounds = array<i64: 32, 8>}, {pipeline_mode = #tpu.pipeline_mode<synchronous>, transform_indices = @transform_2, window_bounds = array<i64: 32, 32>}, {transform_indices = @transform_3, window_bounds = array<i64: 8, 128>}, {transform_indices = @transform_4, window_bounds = array<i64: 32, 128>}]} {
    %c0 = arith.constant 0 : index
    %0 = memref.load %arg1[%c0] : memref<1xf32, #tpu.memory_space<smem>>
    %c0_0 = arith.constant 0 : index
    %c0_1 = arith.constant 0 : index
    %1 = vector.load %arg2[%c0_0, %c0_1] : memref<32x8xbf16, #tpu.memory_space<vmem>>, vector<32x8xbf16>
    %c0_2 = arith.constant 0 : index
    %c0_3 = arith.constant 0 : index
    %2 = vector.load %arg3[%c0_2, %c0_3] : memref<32x32xbf16, #tpu.memory_space<vmem>>, vector<32x32xbf16>
    %c0_4 = arith.constant 0 : index
    %c0_5 = arith.constant 0 : index
    %3 = vector.load %arg4[%c0_4, %c0_5] : memref<8x128xbf16, #tpu.memory_space<vmem>>, vector<8x128xbf16>
    %cst = arith.constant dense<0.000000e+00> : vector<32x128xf32>
    %4 = tpu.matmul %1, %3, %cst {dimension_numbers = #tpu.dot_dimension_numbers<[1], [0], [0], [1], [0, 0, 1, 1], [], []>} : vector<32x8xbf16>, vector<8x128xbf16>, vector<32x128xf32> -> vector<32x128xf32>
    %cst_6 = arith.constant 0.000000e+00 : f32
    %5 = arith.subf %cst_6, %0 : f32
    %6 = vector.broadcast %5 : f32 to vector<32x128xf32>
    %7 = arith.maximumf %6, %4 : vector<32x128xf32>
    %8 = vector.broadcast %0 : f32 to vector<32x128xf32>
    %9 = arith.minimumf %8, %7 : vector<32x128xf32>
    %10 = arith.subf %4, %9 : vector<32x128xf32>
    %11 = arith.truncf %10 : vector<32x128xf32> to vector<32x128xbf16>
    %cst_7 = arith.constant dense<0.000000e+00> : vector<32x128xf32>
    %12 = tpu.matmul %2, %11, %cst_7 {dimension_numbers = #tpu.dot_dimension_numbers<[1], [0], [0], [1], [0, 0, 1, 1], [], []>} : vector<32x32xbf16>, vector<32x128xbf16>, vector<32x128xf32> -> vector<32x128xf32>
    %13 = arith.addf %4, %12 : vector<32x128xf32>
    %cst_8 = arith.constant 0.000000e+00 : f32
    %14 = arith.subf %cst_8, %0 : f32
    %15 = vector.broadcast %14 : f32 to vector<32x128xf32>
    %16 = arith.maximumf %15, %13 : vector<32x128xf32>
    %17 = vector.broadcast %0 : f32 to vector<32x128xf32>
    %18 = arith.minimumf %17, %16 : vector<32x128xf32>
    %19 = arith.subf %13, %18 : vector<32x128xf32>
    %20 = arith.truncf %19 : vector<32x128xf32> to vector<32x128xbf16>
    %cst_9 = arith.constant dense<0.000000e+00> : vector<32x128xf32>
    %21 = tpu.matmul %2, %20, %cst_9 {dimension_numbers = #tpu.dot_dimension_numbers<[1], [0], [0], [1], [0, 0, 1, 1], [], []>} : vector<32x32xbf16>, vector<32x128xbf16>, vector<32x128xf32> -> vector<32x128xf32>
    %22 = arith.addf %4, %21 : vector<32x128xf32>
    %cst_10 = arith.constant 0.000000e+00 : f32
    %23 = arith.subf %cst_10, %0 : f32
    %24 = vector.broadcast %23 : f32 to vector<32x128xf32>
    %25 = arith.maximumf %24, %22 : vector<32x128xf32>
    %26 = vector.broadcast %0 : f32 to vector<32x128xf32>
    %27 = arith.minimumf %26, %25 : vector<32x128xf32>
    %28 = arith.subf %22, %27 : vector<32x128xf32>
    %29 = arith.truncf %28 : vector<32x128xf32> to vector<32x128xbf16>
    %cst_11 = arith.constant dense<0.000000e+00> : vector<32x128xf32>
    %30 = tpu.matmul %2, %29, %cst_11 {dimension_numbers = #tpu.dot_dimension_numbers<[1], [0], [0], [1], [0, 0, 1, 1], [], []>} : vector<32x32xbf16>, vector<32x128xbf16>, vector<32x128xf32> -> vector<32x128xf32>
    %31 = arith.addf %4, %30 : vector<32x128xf32>
    %cst_12 = arith.constant 0.000000e+00 : f32
    %32 = arith.subf %cst_12, %0 : f32
    %33 = vector.broadcast %32 : f32 to vector<32x128xf32>
    %34 = arith.maximumf %33, %31 : vector<32x128xf32>
    %35 = vector.broadcast %0 : f32 to vector<32x128xf32>
    %36 = arith.minimumf %35, %34 : vector<32x128xf32>
    %37 = arith.subf %31, %36 : vector<32x128xf32>
    %38 = arith.truncf %37 : vector<32x128xf32> to vector<32x128xbf16>
    %cst_13 = arith.constant dense<0.000000e+00> : vector<32x128xf32>
    %39 = tpu.matmul %2, %38, %cst_13 {dimension_numbers = #tpu.dot_dimension_numbers<[1], [0], [0], [1], [0, 0, 1, 1], [], []>} : vector<32x32xbf16>, vector<32x128xbf16>, vector<32x128xf32> -> vector<32x128xf32>
    %40 = arith.addf %4, %39 : vector<32x128xf32>
    %cst_14 = arith.constant 0.000000e+00 : f32
    %41 = arith.subf %cst_14, %0 : f32
    %42 = vector.broadcast %41 : f32 to vector<32x128xf32>
    %43 = arith.maximumf %42, %40 : vector<32x128xf32>
    %44 = vector.broadcast %0 : f32 to vector<32x128xf32>
    %45 = arith.minimumf %44, %43 : vector<32x128xf32>
    %46 = arith.subf %40, %45 : vector<32x128xf32>
    %47 = arith.truncf %46 : vector<32x128xf32> to vector<32x128xbf16>
    %cst_15 = arith.constant dense<0.000000e+00> : vector<32x128xf32>
    %48 = tpu.matmul %2, %47, %cst_15 {dimension_numbers = #tpu.dot_dimension_numbers<[1], [0], [0], [1], [0, 0, 1, 1], [], []>} : vector<32x32xbf16>, vector<32x128xbf16>, vector<32x128xf32> -> vector<32x128xf32>
    %49 = arith.addf %4, %48 : vector<32x128xf32>
    %cst_16 = arith.constant 0.000000e+00 : f32
    %50 = arith.subf %cst_16, %0 : f32
    %51 = vector.broadcast %50 : f32 to vector<32x128xf32>
    %52 = arith.maximumf %51, %49 : vector<32x128xf32>
    %53 = vector.broadcast %0 : f32 to vector<32x128xf32>
    %54 = arith.minimumf %53, %52 : vector<32x128xf32>
    %55 = arith.subf %49, %54 : vector<32x128xf32>
    %56 = arith.truncf %55 : vector<32x128xf32> to vector<32x128xbf16>
    %cst_17 = arith.constant dense<0.000000e+00> : vector<32x128xf32>
    %57 = tpu.matmul %2, %56, %cst_17 {dimension_numbers = #tpu.dot_dimension_numbers<[1], [0], [0], [1], [0, 0, 1, 1], [], []>} : vector<32x32xbf16>, vector<32x128xbf16>, vector<32x128xf32> -> vector<32x128xf32>
    %58 = arith.addf %4, %57 : vector<32x128xf32>
    %cst_18 = arith.constant 0.000000e+00 : f32
    %59 = arith.subf %cst_18, %0 : f32
    %60 = vector.broadcast %59 : f32 to vector<32x128xf32>
    %61 = arith.maximumf %60, %58 : vector<32x128xf32>
    %62 = vector.broadcast %0 : f32 to vector<32x128xf32>
    %63 = arith.minimumf %62, %61 : vector<32x128xf32>
    %64 = arith.subf %58, %63 : vector<32x128xf32>
    %65 = arith.truncf %64 : vector<32x128xf32> to vector<32x128xbf16>
    %cst_19 = arith.constant dense<0.000000e+00> : vector<32x128xf32>
    %66 = tpu.matmul %2, %65, %cst_19 {dimension_numbers = #tpu.dot_dimension_numbers<[1], [0], [0], [1], [0, 0, 1, 1], [], []>} : vector<32x32xbf16>, vector<32x128xbf16>, vector<32x128xf32> -> vector<32x128xf32>
    %67 = arith.addf %4, %66 : vector<32x128xf32>
    %cst_20 = arith.constant 0.000000e+00 : f32
    %68 = arith.subf %cst_20, %0 : f32
    %69 = vector.broadcast %68 : f32 to vector<32x128xf32>
    %70 = arith.maximumf %69, %67 : vector<32x128xf32>
    %71 = vector.broadcast %0 : f32 to vector<32x128xf32>
    %72 = arith.minimumf %71, %70 : vector<32x128xf32>
    %73 = arith.subf %67, %72 : vector<32x128xf32>
    %74 = arith.truncf %73 : vector<32x128xf32> to vector<32x128xbf16>
    %cst_21 = arith.constant dense<0.000000e+00> : vector<32x128xf32>
    %75 = tpu.matmul %2, %74, %cst_21 {dimension_numbers = #tpu.dot_dimension_numbers<[1], [0], [0], [1], [0, 0, 1, 1], [], []>} : vector<32x32xbf16>, vector<32x128xbf16>, vector<32x128xf32> -> vector<32x128xf32>
    %76 = arith.addf %4, %75 : vector<32x128xf32>
    %cst_22 = arith.constant 0.000000e+00 : f32
    %77 = arith.subf %cst_22, %0 : f32
    %78 = vector.broadcast %77 : f32 to vector<32x128xf32>
    %79 = arith.maximumf %78, %76 : vector<32x128xf32>
    %80 = vector.broadcast %0 : f32 to vector<32x128xf32>
    %81 = arith.minimumf %80, %79 : vector<32x128xf32>
    %82 = arith.subf %76, %81 : vector<32x128xf32>
    %83 = arith.truncf %82 : vector<32x128xf32> to vector<32x128xbf16>
    %cst_23 = arith.constant dense<0.000000e+00> : vector<32x128xf32>
    %84 = tpu.matmul %2, %83, %cst_23 {dimension_numbers = #tpu.dot_dimension_numbers<[1], [0], [0], [1], [0, 0, 1, 1], [], []>} : vector<32x32xbf16>, vector<32x128xbf16>, vector<32x128xf32> -> vector<32x128xf32>
    %85 = arith.addf %4, %84 : vector<32x128xf32>
    %cst_24 = arith.constant 0.000000e+00 : f32
    %86 = arith.subf %cst_24, %0 : f32
    %87 = vector.broadcast %86 : f32 to vector<32x128xf32>
    %88 = arith.maximumf %87, %85 : vector<32x128xf32>
    %89 = vector.broadcast %0 : f32 to vector<32x128xf32>
    %90 = arith.minimumf %89, %88 : vector<32x128xf32>
    %91 = arith.subf %85, %90 : vector<32x128xf32>
    %92 = arith.truncf %91 : vector<32x128xf32> to vector<32x128xbf16>
    %cst_25 = arith.constant dense<0.000000e+00> : vector<32x128xf32>
    %93 = tpu.matmul %2, %92, %cst_25 {dimension_numbers = #tpu.dot_dimension_numbers<[1], [0], [0], [1], [0, 0, 1, 1], [], []>} : vector<32x32xbf16>, vector<32x128xbf16>, vector<32x128xf32> -> vector<32x128xf32>
    %94 = arith.addf %4, %93 : vector<32x128xf32>
    %cst_26 = arith.constant 0.000000e+00 : f32
    %95 = arith.subf %cst_26, %0 : f32
    %96 = vector.broadcast %95 : f32 to vector<32x128xf32>
    %97 = arith.maximumf %96, %94 : vector<32x128xf32>
    %98 = vector.broadcast %0 : f32 to vector<32x128xf32>
    %99 = arith.minimumf %98, %97 : vector<32x128xf32>
    %100 = arith.subf %94, %99 : vector<32x128xf32>
    %101 = arith.truncf %100 : vector<32x128xf32> to vector<32x128xbf16>
    %cst_27 = arith.constant dense<0.000000e+00> : vector<32x128xf32>
    %102 = tpu.matmul %2, %101, %cst_27 {dimension_numbers = #tpu.dot_dimension_numbers<[1], [0], [0], [1], [0, 0, 1, 1], [], []>} : vector<32x32xbf16>, vector<32x128xbf16>, vector<32x128xf32> -> vector<32x128xf32>
    %103 = arith.addf %4, %102 : vector<32x128xf32>
    %cst_28 = arith.constant 0.000000e+00 : f32
    %104 = arith.subf %cst_28, %0 : f32
    %105 = vector.broadcast %104 : f32 to vector<32x128xf32>
    %106 = arith.maximumf %105, %103 : vector<32x128xf32>
    %107 = vector.broadcast %0 : f32 to vector<32x128xf32>
    %108 = arith.minimumf %107, %106 : vector<32x128xf32>
    %109 = arith.subf %103, %108 : vector<32x128xf32>
    %110 = arith.truncf %109 : vector<32x128xf32> to vector<32x128xbf16>
    %cst_29 = arith.constant dense<0.000000e+00> : vector<32x128xf32>
    %111 = tpu.matmul %2, %110, %cst_29 {dimension_numbers = #tpu.dot_dimension_numbers<[1], [0], [0], [1], [0, 0, 1, 1], [], []>} : vector<32x32xbf16>, vector<32x128xbf16>, vector<32x128xf32> -> vector<32x128xf32>
    %112 = arith.addf %4, %111 : vector<32x128xf32>
    %cst_30 = arith.constant 0.000000e+00 : f32
    %113 = arith.subf %cst_30, %0 : f32
    %114 = vector.broadcast %113 : f32 to vector<32x128xf32>
    %115 = arith.maximumf %114, %112 : vector<32x128xf32>
    %116 = vector.broadcast %0 : f32 to vector<32x128xf32>
    %117 = arith.minimumf %116, %115 : vector<32x128xf32>
    %118 = arith.subf %112, %117 : vector<32x128xf32>
    %119 = arith.truncf %118 : vector<32x128xf32> to vector<32x128xbf16>
    %cst_31 = arith.constant dense<0.000000e+00> : vector<32x128xf32>
    %120 = tpu.matmul %2, %119, %cst_31 {dimension_numbers = #tpu.dot_dimension_numbers<[1], [0], [0], [1], [0, 0, 1, 1], [], []>} : vector<32x32xbf16>, vector<32x128xbf16>, vector<32x128xf32> -> vector<32x128xf32>
    %121 = arith.addf %4, %120 : vector<32x128xf32>
    %cst_32 = arith.constant 0.000000e+00 : f32
    %122 = arith.subf %cst_32, %0 : f32
    %123 = vector.broadcast %122 : f32 to vector<32x128xf32>
    %124 = arith.maximumf %123, %121 : vector<32x128xf32>
    %125 = vector.broadcast %0 : f32 to vector<32x128xf32>
    %126 = arith.minimumf %125, %124 : vector<32x128xf32>
    %127 = arith.subf %121, %126 : vector<32x128xf32>
    %128 = arith.truncf %127 : vector<32x128xf32> to vector<32x128xbf16>
    %cst_33 = arith.constant dense<0.000000e+00> : vector<32x128xf32>
    %129 = tpu.matmul %2, %128, %cst_33 {dimension_numbers = #tpu.dot_dimension_numbers<[1], [0], [0], [1], [0, 0, 1, 1], [], []>} : vector<32x32xbf16>, vector<32x128xbf16>, vector<32x128xf32> -> vector<32x128xf32>
    %130 = arith.addf %4, %129 : vector<32x128xf32>
    %cst_34 = arith.constant 0.000000e+00 : f32
    %131 = arith.subf %cst_34, %0 : f32
    %132 = vector.broadcast %131 : f32 to vector<32x128xf32>
    %133 = arith.maximumf %132, %130 : vector<32x128xf32>
    %134 = vector.broadcast %0 : f32 to vector<32x128xf32>
    %135 = arith.minimumf %134, %133 : vector<32x128xf32>
    %136 = arith.subf %130, %135 : vector<32x128xf32>
    %137 = arith.truncf %136 : vector<32x128xf32> to vector<32x128xbf16>
    %cst_35 = arith.constant dense<0.000000e+00> : vector<32x128xf32>
    %138 = tpu.matmul %2, %137, %cst_35 {dimension_numbers = #tpu.dot_dimension_numbers<[1], [0], [0], [1], [0, 0, 1, 1], [], []>} : vector<32x32xbf16>, vector<32x128xbf16>, vector<32x128xf32> -> vector<32x128xf32>
    %139 = arith.addf %4, %138 : vector<32x128xf32>
    %cst_36 = arith.constant 0.000000e+00 : f32
    %140 = arith.subf %cst_36, %0 : f32
    %141 = vector.broadcast %140 : f32 to vector<32x128xf32>
    %142 = arith.maximumf %141, %139 : vector<32x128xf32>
    %143 = vector.broadcast %0 : f32 to vector<32x128xf32>
    %144 = arith.minimumf %143, %142 : vector<32x128xf32>
    %145 = arith.subf %139, %144 : vector<32x128xf32>
    %c0_37 = arith.constant 0 : index
    %c0_38 = arith.constant 0 : index
    %146 = vector.load %arg5[%c0_37, %c0_38] : memref<32x128xf32, #tpu.memory_space<vmem>>, vector<32x128xf32>
    tpu.vector_store %arg5[%c0_37, %c0_38], %145 {strides = array<i32>} : memref<32x128xf32, #tpu.memory_space<vmem>>, vector<32x128xf32>,
    return
  }
  func.func @transform_0(%arg0: i32) -> i32 {
    %c0_i32 = arith.constant 0 : i32
    %c0_i32_0 = arith.constant 0 : i32
    return %c0_i32 : i32
  }
  func.func @transform_1(%arg0: i32) -> (i32, i32) {
    %c0_i32 = arith.constant 0 : i32
    %c0_i32_0 = arith.constant 0 : i32
    %c0_i32_1 = arith.constant 0 : i32
    return %c0_i32, %c0_i32_0 : i32, i32
  }
  func.func @transform_2(%arg0: i32) -> (i32, i32) {
    %c0_i32 = arith.constant 0 : i32
    %c0_i32_0 = arith.constant 0 : i32
    %c0_i32_1 = arith.constant 0 : i32
    return %c0_i32, %c0_i32_0 : i32, i32
  }
  func.func @transform_3(%arg0: i32) -> (i32, i32) {
    %c0_i32 = arith.constant 0 : i32
    %c0_i32_0 = arith.constant 0 : i32
    return %c0_i32, %arg0 : i32, i32
  }
  func.func @transform_4(%arg0: i32) -> (i32, i32) {
    %c0_i32 = arith.constant 0 : i32
    %c0_i32_0 = arith.constant 0 : i32
    return %c0_i32, %arg0 : i32, i32
  }
}

</mosaic_0001>

<llo_original>
// kernel: tpu_custom_call.1
$region0: #{tpu_custom_call.1}
  #allocation0 [shape = 'u32[]', space=smem, size = 0x4, offset = 0x4, fixed_abs, tag = 'smem constant byte address 0x4 - core index']
  #allocation1 [shape = 'u32[144,128]{1,0:T(1,128)}', space=vmem, size = 0x12000, scoped, tag = 'internal scratch']
  #allocation2 [shape = 'f32[1]{0:T(128)S(6)}', space=smem, size = 0x200, scoped, tag = 'scoped memory for tpu_custom_call.1']
  %s0 = inlined_call_operand.<no memory space> [shape: f32[1], index: 0, kind: input, shape index: {}]
  %s1 = inlined_call_operand.vmem [shape: bf16[32,8], index: 1, kind: input, shape index: {}]
  %s2 = inlined_call_operand.vmem [shape: bf16[32,32], index: 2, kind: input, shape index: {}]
  %s3 = inlined_call_operand.vmem [shape: bf16[8,128], index: 3, kind: input, shape index: {}]
  %s4 = inlined_call_operand.hbm [shape: f32[32,128], index: 4, kind: output, shape index: {}]
  %s5 = sld [smem:[#allocation0]]
  $region26: #{tpu_custom_call.1} parent=0
    _
  %s7 = ssub.s32 1, %s5
  %s8 = scalar_select 0, %s7, %s5
  %9 = sst [smem:[#allocation2]] %s0
  $region1: #{tpu_custom_call.1} parent=0
    #allocation3 [shape = 'u8[16384]{0}', space=vmem, size = 0x4000, scoped, tag = 'output window, operand 0, single buffered']
    #allocation4 [shape = 's32[1]{0}', space=sflag, size = 0x4, scoped, tag = 'scoped memory for tpu_custom_call.1']
    %10 = vsyncpa [#allocation4], 0
    // Predicated region
    $region2: #{tpu_custom_call.1} parent=1 // pred_check
      _
    $region3: #{tpu_custom_call.1} parent=1 // pred_check_branch
      %12 = sbr.rel (0) target = $region5
    $region4: #{tpu_custom_call.1} parent=1 // pred_region
      _
    $region5: #{tpu_custom_call.1} parent=1 // pred_fallthru
      _
    // Predicated region
    $region6: #{tpu_custom_call.1} parent=1 // pred_check
      _
    $region7: #{tpu_custom_call.1} parent=1 // pred_check_branch
      %14 = sbr.rel (0) target = $region9
    $region8: #{tpu_custom_call.1} parent=1 // pred_region
      _
    $region9: #{tpu_custom_call.1} parent=1 // pred_fallthru
      _
    // Predicated region
    $region10: #{tpu_custom_call.1} parent=1 // pred_check
      _
    $region11: #{tpu_custom_call.1} parent=1 // pred_check_branch
      %16 = sbr.rel (0) target = $region13
    $region12: #{tpu_custom_call.1} parent=1 // pred_region
      _
    $region13: #{tpu_custom_call.1} parent=1 // pred_fallthru
      _
    // Predicated region
    $region14: #{tpu_custom_call.1} parent=1 // pred_check
      _
    $region15: #{tpu_custom_call.1} parent=1 // pred_check_branch
      %18 = sbr.rel (0) target = $region17
    $region16: #{tpu_custom_call.1} parent=1 // pred_region
      _
    $region17: #{tpu_custom_call.1} parent=1 // pred_fallthru
      _
    %s20 = sld [smem:[#allocation2]]
    %v21 = vld [vmem:[%s1] sm:$0xf]
    %v22 = vld [vmem:[%s1 + $0x4] sm:$0xf]
    %v23 = vld [vmem:[%s1 + $0x8] sm:$0xf]
    %v24 = vld [vmem:[%s1 + $0xc] sm:$0xf]
    %v25 = vld [vmem:[%s2] sm:$0xf]
    %v26 = vld [vmem:[%s2 + $0x4] sm:$0xf]
    %v27 = vld [vmem:[%s2 + $0x8] sm:$0xf]
    %v28 = vld [vmem:[%s2 + $0xc] sm:$0xf]
    %v29 = vld [vmem:[%s3] sm:$0xf]
    %v34 = vunpack.c.l.b16 %v21
    %v35 = vunpack.c.l.b16 %v22
    %v36 = vunpack.c.l.b16 %v23
    %v37 = vunpack.c.l.b16 %v24
    %v38 = vpack.c.b16 %v35, %v34
    %v39 = vpack.c.b16 %v37, %v36
    %vm40 = vcmask 64512
    %v42 = vsel %vm40, %v38, 0
    %v45 = vsel %vm40, %v39, 0
    %vm47 = vcmask 1043456
    %v49 = vsel %vm47, %v29, 0
    %51 = vmatprep.subr.bf16.mxu0 0
    %52 = vmatpush1.bf16.msra.mxu0 0
    %53 = vmatprep.subr.bf16.mxu0 0
    %54 = vmatpush1.bf16.msra.mxu0 0
    %55 = vmatprep.subr.bf16.mxu0 0
    %56 = vmatpush1.bf16.msra.mxu0 0
    %57 = vmatprep.subr.bf16.mxu0 0
    %58 = vmatpush1.bf16.msra.mxu0 0
    %59 = vmatprep.subr.bf16.mxu0 0
    %60 = vmatpush1.bf16.msra.mxu0 0
    %61 = vmatprep.subr.bf16.mxu0 0
    %62 = vmatpush1.bf16.msra.mxu0 0
    %63 = vmatprep.subr.bf16.mxu0 0
    %64 = vmatpush1.bf16.msra.mxu0 0
    %65 = vmatprep.subr.bf16.mxu0 0
    %66 = vmatpush1.bf16.msra.mxu0 %v49
    %67 = vmatprep.subr.bf16.mxu0 0
    %68 = vmatpush2.bf16.msra.mxu0 0
    %69 = vmatprep.subr.bf16.mxu0 0
    %70 = vmatpush2.bf16.msra.mxu0 0
    %71 = vmatprep.subr.bf16.mxu0 0
    %72 = vmatpush2.bf16.msra.mxu0 0
    %73 = vmatprep.subr.bf16.mxu0 0
    %74 = vmatpush2.bf16.msra.mxu0 0
    %75 = vmatprep.subr.bf16.mxu0 0
    %76 = vmatpush2.bf16.msra.mxu0 0
    %77 = vmatprep.subr.bf16.mxu0 0
    %78 = vmatpush2.bf16.msra.mxu0 0
    %79 = vmatprep.subr.bf16.mxu0 0
    %80 = vmatpush2.bf16.msra.mxu0 0
    %81 = vmatprep.subr.bf16.mxu0 0
    %82 = vmatpush2.bf16.msra.mxu0 0
    %83 = vmatprep.mubr.bf16.mxu0 0
    %84 = vmatmul.mubr.bf16.gmra.mxu0 %v42
    %v85 = vpop.f32.mrf.mxu0
    %v86 = vadd.f32 0.0, %v85
    %v87 = vpop.f32.mrf.mxu0
    %v88 = vpop.f32.mrf.mxu0
    %v89 = vadd.f32 0.0, %v88
    %v90 = vpop.f32.mrf.mxu0
    %91 = vmatprep.mubr.bf16.mxu0 0
    %92 = vmatmul.mubr.bf16.gmra.mxu0 %v45
    %v93 = vpop.f32.mrf.mxu0
    %v94 = vadd.f32 0.0, %v93
    %v95 = vpop.f32.mrf.mxu0
    %v96 = vpop.f32.mrf.mxu0
    %v97 = vadd.f32 0.0, %v96
    %v98 = vpop.f32.mrf.mxu0
    %99 = vdwg.mxu0
    %s100 = ssub.f32 0.0, %s20
    %v101 = vstv %s100
    %v102 = vmax.f32 %v101, %v86
    %v103 = vmax.f32 %v101, %v89
    %v104 = vmax.f32 %v101, %v94
    %v105 = vmax.f32 %v101, %v97
    %v106 = vstv %s20
    %v107 = vmin.f32 %v106, %v102
    %v108 = vmin.f32 %v106, %v103
    %v109 = vmin.f32 %v106, %v104
    %v110 = vmin.f32 %v106, %v105
    %v111 = vsub.f32 %v86, %v107
    %v112 = vsub.f32 %v89, %v108
    %v113 = vsub.f32 %v94, %v109
    %v114 = vsub.f32 %v97, %v110
    %v115 = vpack.c.bf16 %v112, %v111
    %v116 = vpack.c.bf16 %v114, %v113
    %v121 = vunpack.c.l.b16 %v25
    %v122 = vunpack.c.l.b16 %v26
    %v123 = vunpack.c.l.b16 %v27
    %v124 = vunpack.c.l.b16 %v28
    %v125 = vpack.c.b16 %v122, %v121
    %v126 = vpack.c.b16 %v124, %v123
    %vm127 = vcmask 261120
    %v129 = vsel %vm127, %v125, 0
    %v132 = vsel %vm127, %v126, 0
    %134 = vmatprep.subr.bf16.mxu0 0
    %135 = vmatpush1.bf16.msra.mxu0 0
    %136 = vmatprep.subr.bf16.mxu0 0
    %137 = vmatpush1.bf16.msra.mxu0 0
    %138 = vmatprep.subr.bf16.mxu0 0
    %139 = vmatpush1.bf16.msra.mxu0 0
    %140 = vmatprep.subr.bf16.mxu0 0
    %141 = vmatpush1.bf16.msra.mxu0 0
    %142 = vmatprep.subr.bf16.mxu0 0
    %143 = vmatpush1.bf16.msra.mxu0 0
    %144 = vmatprep.subr.bf16.mxu0 0
    %145 = vmatpush1.bf16.msra.mxu0 0
    %146 = vmatprep.subr.bf16.mxu0 0
    %147 = vmatpush1.bf16.msra.mxu0 %v116
    %148 = vmatprep.subr.bf16.mxu0 0
    %149 = vmatpush1.bf16.msra.mxu0 %v115
    %150 = vmatprep.subr.bf16.mxu0 0
    %151 = vmatpush2.bf16.msra.mxu0 0
    %152 = vmatprep.subr.bf16.mxu0 0
    %153 = vmatpush2.bf16.msra.mxu0 0
    %154 = vmatprep.subr.bf16.mxu0 0
    %155 = vmatpush2.bf16.msra.mxu0 0
    %156 = vmatprep.subr.bf16.mxu0 0
    %157 = vmatpush2.bf16.msra.mxu0 0
    %158 = vmatprep.subr.bf16.mxu0 0
    %159 = vmatpush2.bf16.msra.mxu0 0
    %160 = vmatprep.subr.bf16.mxu0 0
    %161 = vmatpush2.bf16.msra.mxu0 0
    %162 = vmatprep.subr.bf16.mxu0 0
    %163 = vmatpush2.bf16.msra.mxu0 0
    %164 = vmatprep.subr.bf16.mxu0 0
    %165 = vmatpush2.bf16.msra.mxu0 0
    %166 = vmatprep.mubr.bf16.mxu0 0
    %167 = vmatmul.mubr.bf16.gmra.mxu0 %v129
    %v168 = vpop.f32.mrf.mxu0
    %v169 = vadd.f32 0.0, %v168
    %v170 = vpop.f32.mrf.mxu0
    %v171 = vpop.f32.mrf.mxu0
    %v172 = vadd.f32 0.0, %v171
    %v173 = vpop.f32.mrf.mxu0
    %174 = vmatprep.mubr.bf16.mxu0 0
    %175 = vmatmul.mubr.bf16.gmra.mxu0 %v132
    %v176 = vpop.f32.mrf.mxu0
    %v177 = vadd.f32 0.0, %v176
    %v178 = vpop.f32.mrf.mxu0
    %v179 = vpop.f32.mrf.mxu0
    %v180 = vadd.f32 0.0, %v179
    %v181 = vpop.f32.mrf.mxu0
    %182 = vdwg.mxu0
    %v183 = vadd.f32 %v86, %v169
    %v184 = vadd.f32 %v89, %v172
    %v185 = vadd.f32 %v94, %v177
    %v186 = vadd.f32 %v97, %v180
    %v187 = vmax.f32 %v101, %v183
    %v188 = vmax.f32 %v101, %v184
    %v189 = vmax.f32 %v101, %v185
    %v190 = vmax.f32 %v101, %v186
    %v191 = vmin.f32 %v106, %v187
    %v192 = vmin.f32 %v106, %v188
    %v193 = vmin.f32 %v106, %v189
    %v194 = vmin.f32 %v106, %v190
    %v195 = vsub.f32 %v183, %v191
    %v196 = vsub.f32 %v184, %v192
    %v197 = vsub.f32 %v185, %v193
    %v198 = vsub.f32 %v186, %v194
    %v199 = vpack.c.bf16 %v196, %v195
    %v200 = vpack.c.bf16 %v198, %v197
    %201 = vmatprep.subr.bf16.mxu0 0
    %202 = vmatpush1.bf16.msra.mxu0 0
    %203 = vmatprep.subr.bf16.mxu0 0
    %204 = vmatpush1.bf16.msra.mxu0 0
    %205 = vmatprep.subr.bf16.mxu0 0
    %206 = vmatpush1.bf16.msra.mxu0 0
    %207 = vmatprep.subr.bf16.mxu0 0
    %208 = vmatpush1.bf16.msra.mxu0 0
    %209 = vmatprep.subr.bf16.mxu0 0
    %210 = vmatpush1.bf16.msra.mxu0 0
    %211 = vmatprep.subr.bf16.mxu0 0
    %212 = vmatpush1.bf16.msra.mxu0 0
    %213 = vmatprep.subr.bf16.mxu0 0
    %214 = vmatpush1.bf16.msra.mxu0 %v200
    %215 = vmatprep.subr.bf16.mxu0 0
    %216 = vmatpush1.bf16.msra.mxu0 %v199
    %217 = vmatprep.subr.bf16.mxu0 0
    %218 = vmatpush2.bf16.msra.mxu0 0
    %219 = vmatprep.subr.bf16.mxu0 0
    %220 = vmatpush2.bf16.msra.mxu0 0
    %221 = vmatprep.subr.bf16.mxu0 0
    %222 = vmatpush2.bf16.msra.mxu0 0
    %223 = vmatprep.subr.bf16.mxu0 0
    %224 = vmatpush2.bf16.msra.mxu0 0
    %225 = vmatprep.subr.bf16.mxu0 0
    %226 = vmatpush2.bf16.msra.mxu0 0
    %227 = vmatprep.subr.bf16.mxu0 0
    %228 = vmatpush2.bf16.msra.mxu0 0
    %229 = vmatprep.subr.bf16.mxu0 0
    %230 = vmatpush2.bf16.msra.mxu0 0
    %231 = vmatprep.subr.bf16.mxu0 0
    %232 = vmatpush2.bf16.msra.mxu0 0
    %233 = vmatprep.mubr.bf16.mxu0 0
    %234 = vmatmul.mubr.bf16.gmra.mxu0 %v129
    %v235 = vpop.f32.mrf.mxu0
    %v236 = vadd.f32 0.0, %v235
    %v237 = vpop.f32.mrf.mxu0
    %v238 = vpop.f32.mrf.mxu0
    %v239 = vadd.f32 0.0, %v238
    %v240 = vpop.f32.mrf.mxu0
    %241 = vmatprep.mubr.bf16.mxu0 0
    %242 = vmatmul.mubr.bf16.gmra.mxu0 %v132
    %v243 = vpop.f32.mrf.mxu0
    %v244 = vadd.f32 0.0, %v243
    %v245 = vpop.f32.mrf.mxu0
    %v246 = vpop.f32.mrf.mxu0
    %v247 = vadd.f32 0.0, %v246
    %v248 = vpop.f32.mrf.mxu0
    %249 = vdwg.mxu0
    %v250 = vadd.f32 %v86, %v236
    %v251 = vadd.f32 %v89, %v239
    %v252 = vadd.f32 %v94, %v244
    %v253 = vadd.f32 %v97, %v247
    %v254 = vmax.f32 %v101, %v250
    %v255 = vmax.f32 %v101, %v251
    %v256 = vmax.f32 %v101, %v252
    %v257 = vmax.f32 %v101, %v253
    %v258 = vmin.f32 %v106, %v254
    %v259 = vmin.f32 %v106, %v255
    %v260 = vmin.f32 %v106, %v256
    %v261 = vmin.f32 %v106, %v257
    %v262 = vsub.f32 %v250, %v258
    %v263 = vsub.f32 %v251, %v259
    %v264 = vsub.f32 %v252, %v260
    %v265 = vsub.f32 %v253, %v261
    %v266 = vpack.c.bf16 %v263, %v262
    %v267 = vpack.c.bf16 %v265, %v264
    %268 = vmatprep.subr.bf16.mxu0 0
    %269 = vmatpush1.bf16.msra.mxu0 0
    %270 = vmatprep.subr.bf16.mxu0 0
    %271 = vmatpush1.bf16.msra.mxu0 0
    %272 = vmatprep.subr.bf16.mxu0 0
    %273 = vmatpush1.bf16.msra.mxu0 0
    %274 = vmatprep.subr.bf16.mxu0 0
    %275 = vmatpush1.bf16.msra.mxu0 0
    %276 = vmatprep.subr.bf16.mxu0 0
    %277 = vmatpush1.bf16.msra.mxu0 0
    %278 = vmatprep.subr.bf16.mxu0 0
    %279 = vmatpush1.bf16.msra.mxu0 0
    %280 = vmatprep.subr.bf16.mxu0 0
    %281 = vmatpush1.bf16.msra.mxu0 %v267
    %282 = vmatprep.subr.bf16.mxu0 0
    %283 = vmatpush1.bf16.msra.mxu0 %v266
    %284 = vmatprep.subr.bf16.mxu0 0
    %285 = vmatpush2.bf16.msra.mxu0 0
    %286 = vmatprep.subr.bf16.mxu0 0
    %287 = vmatpush2.bf16.msra.mxu0 0
    %288 = vmatprep.subr.bf16.mxu0 0
    %289 = vmatpush2.bf16.msra.mxu0 0
    %290 = vmatprep.subr.bf16.mxu0 0
    %291 = vmatpush2.bf16.msra.mxu0 0
    %292 = vmatprep.subr.bf16.mxu0 0
    %293 = vmatpush2.bf16.msra.mxu0 0
    %294 = vmatprep.subr.bf16.mxu0 0
    %295 = vmatpush2.bf16.msra.mxu0 0
    %296 = vmatprep.subr.bf16.mxu0 0
    %297 = vmatpush2.bf16.msra.mxu0 0
    %298 = vmatprep.subr.bf16.mxu0 0
    %299 = vmatpush2.bf16.msra.mxu0 0
    %300 = vmatprep.mubr.bf16.mxu0 0
    %301 = vmatmul.mubr.bf16.gmra.mxu0 %v129
    %v302 = vpop.f32.mrf.mxu0
    %v303 = vadd.f32 0.0, %v302
    %v304 = vpop.f32.mrf.mxu0
    %v305 = vpop.f32.mrf.mxu0
    %v306 = vadd.f32 0.0, %v305
    %v307 = vpop.f32.mrf.mxu0
    %308 = vmatprep.mubr.bf16.mxu0 0
    %309 = vmatmul.mubr.bf16.gmra.mxu0 %v132
    %v310 = vpop.f32.mrf.mxu0
    %v311 = vadd.f32 0.0, %v310
    %v312 = vpop.f32.mrf.mxu0
    %v313 = vpop.f32.mrf.mxu0
    %v314 = vadd.f32 0.0, %v313
    %v315 = vpop.f32.mrf.mxu0
    %316 = vdwg.mxu0
    %v317 = vadd.f32 %v86, %v303
    %v318 = vadd.f32 %v89, %v306
    %v319 = vadd.f32 %v94, %v311
    %v320 = vadd.f32 %v97, %v314
    %v321 = vmax.f32 %v101, %v317
    %v322 = vmax.f32 %v101, %v318
    %v323 = vmax.f32 %v101, %v319
    %v324 = vmax.f32 %v101, %v320
    %v325 = vmin.f32 %v106, %v321
    %v326 = vmin.f32 %v106, %v322
    %v327 = vmin.f32 %v106, %v323
    %v328 = vmin.f32 %v106, %v324
    %v329 = vsub.f32 %v317, %v325
    %v330 = vsub.f32 %v318, %v326
    %v331 = vsub.f32 %v319, %v327
    %v332 = vsub.f32 %v320, %v328
    %v333 = vpack.c.bf16 %v330, %v329
    %v334 = vpack.c.bf16 %v332, %v331
    %335 = vmatprep.subr.bf16.mxu0 0
    %336 = vmatpush1.bf16.msra.mxu0 0
    %337 = vmatprep.subr.bf16.mxu0 0
    %338 = vmatpush1.bf16.msra.mxu0 0
    %339 = vmatprep.subr.bf16.mxu0 0
    %340 = vmatpush1.bf16.msra.mxu0 0
    %341 = vmatprep.subr.bf16.mxu0 0
    %342 = vmatpush1.bf16.msra.mxu0 0
    %343 = vmatprep.subr.bf16.mxu0 0
    %344 = vmatpush1.bf16.msra.mxu0 0
    %345 = vmatprep.subr.bf16.mxu0 0
    %346 = vmatpush1.bf16.msra.mxu0 0
    %347 = vmatprep.subr.bf16.mxu0 0
    %348 = vmatpush1.bf16.msra.mxu0 %v334
    %349 = vmatprep.subr.bf16.mxu0 0
    %350 = vmatpush1.bf16.msra.mxu0 %v333
    %351 = vmatprep.subr.bf16.mxu0 0
    %352 = vmatpush2.bf16.msra.mxu0 0
    %353 = vmatprep.subr.bf16.mxu0 0
    %354 = vmatpush2.bf16.msra.mxu0 0
    %355 = vmatprep.subr.bf16.mxu0 0
    %356 = vmatpush2.bf16.msra.mxu0 0
    %357 = vmatprep.subr.bf16.mxu0 0
    %358 = vmatpush2.bf16.msra.mxu0 0
    %359 = vmatprep.subr.bf16.mxu0 0
    %360 = vmatpush2.bf16.msra.mxu0 0
    %361 = vmatprep.subr.bf16.mxu0 0
    %362 = vmatpush2.bf16.msra.mxu0 0
    %363 = vmatprep.subr.bf16.mxu0 0
    %364 = vmatpush2.bf16.msra.mxu0 0
    %365 = vmatprep.subr.bf16.mxu0 0
    %366 = vmatpush2.bf16.msra.mxu0 0
    %367 = vmatprep.mubr.bf16.mxu0 0
    %368 = vmatmul.mubr.bf16.gmra.mxu0 %v129
    %v369 = vpop.f32.mrf.mxu0
    %v370 = vadd.f32 0.0, %v369
    %v371 = vpop.f32.mrf.mxu0
    %v372 = vpop.f32.mrf.mxu0
    %v373 = vadd.f32 0.0, %v372
    %v374 = vpop.f32.mrf.mxu0
    %375 = vmatprep.mubr.bf16.mxu0 0
    %376 = vmatmul.mubr.bf16.gmra.mxu0 %v132
    %v377 = vpop.f32.mrf.mxu0
    %v378 = vadd.f32 0.0, %v377
    %v379 = vpop.f32.mrf.mxu0
    %v380 = vpop.f32.mrf.mxu0
    %v381 = vadd.f32 0.0, %v380
    %v382 = vpop.f32.mrf.mxu0
    %383 = vdwg.mxu0
    %v384 = vadd.f32 %v86, %v370
    %v385 = vadd.f32 %v89, %v373
    %v386 = vadd.f32 %v94, %v378
    %v387 = vadd.f32 %v97, %v381
    %v388 = vmax.f32 %v101, %v384
    %v389 = vmax.f32 %v101, %v385
    %v390 = vmax.f32 %v101, %v386
    %v391 = vmax.f32 %v101, %v387
    %v392 = vmin.f32 %v106, %v388
    %v393 = vmin.f32 %v106, %v389
    %v394 = vmin.f32 %v106, %v390
    %v395 = vmin.f32 %v106, %v391
    %v396 = vsub.f32 %v384, %v392
    %v397 = vsub.f32 %v385, %v393
    %v398 = vsub.f32 %v386, %v394
    %v399 = vsub.f32 %v387, %v395
    %v400 = vpack.c.bf16 %v397, %v396
    %v401 = vpack.c.bf16 %v399, %v398
    %402 = vmatprep.subr.bf16.mxu0 0
    %403 = vmatpush1.bf16.msra.mxu0 0
    %404 = vmatprep.subr.bf16.mxu0 0
    %405 = vmatpush1.bf16.msra.mxu0 0
    %406 = vmatprep.subr.bf16.mxu0 0
    %407 = vmatpush1.bf16.msra.mxu0 0
    %408 = vmatprep.subr.bf16.mxu0 0
    %409 = vmatpush1.bf16.msra.mxu0 0
    %410 = vmatprep.subr.bf16.mxu0 0
    %411 = vmatpush1.bf16.msra.mxu0 0
    %412 = vmatprep.subr.bf16.mxu0 0
    %413 = vmatpush1.bf16.msra.mxu0 0
    %414 = vmatprep.subr.bf16.mxu0 0
    %415 = vmatpush1.bf16.msra.mxu0 %v401
    %416 = vmatprep.subr.bf16.mxu0 0
    %417 = vmatpush1.bf16.msra.mxu0 %v400
    %418 = vmatprep.subr.bf16.mxu0 0
    %419 = vmatpush2.bf16.msra.mxu0 0
    %420 = vmatprep.subr.bf16.mxu0 0
    %421 = vmatpush2.bf16.msra.mxu0 0
    %422 = vmatprep.subr.bf16.mxu0 0
    %423 = vmatpush2.bf16.msra.mxu0 0
    %424 = vmatprep.subr.bf16.mxu0 0
    %425 = vmatpush2.bf16.msra.mxu0 0
    %426 = vmatprep.subr.bf16.mxu0 0
    %427 = vmatpush2.bf16.msra.mxu0 0
    %428 = vmatprep.subr.bf16.mxu0 0
    %429 = vmatpush2.bf16.msra.mxu0 0
    %430 = vmatprep.subr.bf16.mxu0 0
    %431 = vmatpush2.bf16.msra.mxu0 0
    %432 = vmatprep.subr.bf16.mxu0 0
    %433 = vmatpush2.bf16.msra.mxu0 0
    %434 = vmatprep.mubr.bf16.mxu0 0
    %435 = vmatmul.mubr.bf16.gmra.mxu0 %v129
    %v436 = vpop.f32.mrf.mxu0
    %v437 = vadd.f32 0.0, %v436
    %v438 = vpop.f32.mrf.mxu0
    %v439 = vpop.f32.mrf.mxu0
    %v440 = vadd.f32 0.0, %v439
    %v441 = vpop.f32.mrf.mxu0
    %442 = vmatprep.mubr.bf16.mxu0 0
    %443 = vmatmul.mubr.bf16.gmra.mxu0 %v132
    %v444 = vpop.f32.mrf.mxu0
    %v445 = vadd.f32 0.0, %v444
    %v446 = vpop.f32.mrf.mxu0
    %v447 = vpop.f32.mrf.mxu0
    %v448 = vadd.f32 0.0, %v447
    %v449 = vpop.f32.mrf.mxu0
    %450 = vdwg.mxu0
    %v451 = vadd.f32 %v86, %v437
    %v452 = vadd.f32 %v89, %v440
    %v453 = vadd.f32 %v94, %v445
    %v454 = vadd.f32 %v97, %v448
    %v455 = vmax.f32 %v101, %v451
    %v456 = vmax.f32 %v101, %v452
    %v457 = vmax.f32 %v101, %v453
    %v458 = vmax.f32 %v101, %v454
    %v459 = vmin.f32 %v106, %v455
    %v460 = vmin.f32 %v106, %v456
    %v461 = vmin.f32 %v106, %v457
    %v462 = vmin.f32 %v106, %v458
    %v463 = vsub.f32 %v451, %v459
    %v464 = vsub.f32 %v452, %v460
    %v465 = vsub.f32 %v453, %v461
    %v466 = vsub.f32 %v454, %v462
    %v467 = vpack.c.bf16 %v464, %v463
    %v468 = vpack.c.bf16 %v466, %v465
    %469 = vmatprep.subr.bf16.mxu0 0
    %470 = vmatpush1.bf16.msra.mxu0 0
    %471 = vmatprep.subr.bf16.mxu0 0
    %472 = vmatpush1.bf16.msra.mxu0 0
    %473 = vmatprep.subr.bf16.mxu0 0
    %474 = vmatpush1.bf16.msra.mxu0 0
    %475 = vmatprep.subr.bf16.mxu0 0
    %476 = vmatpush1.bf16.msra.mxu0 0
    %477 = vmatprep.subr.bf16.mxu0 0
    %478 = vmatpush1.bf16.msra.mxu0 0
    %479 = vmatprep.subr.bf16.mxu0 0
    %480 = vmatpush1.bf16.msra.mxu0 0
    %481 = vmatprep.subr.bf16.mxu0 0
    %482 = vmatpush1.bf16.msra.mxu0 %v468
    %483 = vmatprep.subr.bf16.mxu0 0
    %484 = vmatpush1.bf16.msra.mxu0 %v467
    %485 = vmatprep.subr.bf16.mxu0 0
    %486 = vmatpush2.bf16.msra.mxu0 0
    %487 = vmatprep.subr.bf16.mxu0 0
    %488 = vmatpush2.bf16.msra.mxu0 0
    %489 = vmatprep.subr.bf16.mxu0 0
    %490 = vmatpush2.bf16.msra.mxu0 0
    %491 = vmatprep.subr.bf16.mxu0 0
    %492 = vmatpush2.bf16.msra.mxu0 0
    %493 = vmatprep.subr.bf16.mxu0 0
    %494 = vmatpush2.bf16.msra.mxu0 0
    %495 = vmatprep.subr.bf16.mxu0 0
    %496 = vmatpush2.bf16.msra.mxu0 0
    %497 = vmatprep.subr.bf16.mxu0 0
    %498 = vmatpush2.bf16.msra.mxu0 0
    %499 = vmatprep.subr.bf16.mxu0 0
    %500 = vmatpush2.bf16.msra.mxu0 0
    %501 = vmatprep.mubr.bf16.mxu0 0
    %502 = vmatmul.mubr.bf16.gmra.mxu0 %v129
    %v503 = vpop.f32.mrf.mxu0
    %v504 = vadd.f32 0.0, %v503
    %v505 = vpop.f32.mrf.mxu0
    %v506 = vpop.f32.mrf.mxu0
    %v507 = vadd.f32 0.0, %v506
    %v508 = vpop.f32.mrf.mxu0
    %509 = vmatprep.mubr.bf16.mxu0 0
    %510 = vmatmul.mubr.bf16.gmra.mxu0 %v132
    %v511 = vpop.f32.mrf.mxu0
    %v512 = vadd.f32 0.0, %v511
    %v513 = vpop.f32.mrf.mxu0
    %v514 = vpop.f32.mrf.mxu0
    %v515 = vadd.f32 0.0, %v514
    %v516 = vpop.f32.mrf.mxu0
    %517 = vdwg.mxu0
    %v518 = vadd.f32 %v86, %v504
    %v519 = vadd.f32 %v89, %v507
    %v520 = vadd.f32 %v94, %v512
    %v521 = vadd.f32 %v97, %v515
    %v522 = vmax.f32 %v101, %v518
    %v523 = vmax.f32 %v101, %v519
    %v524 = vmax.f32 %v101, %v520
    %v525 = vmax.f32 %v101, %v521
    %v526 = vmin.f32 %v106, %v522
    %v527 = vmin.f32 %v106, %v523
    %v528 = vmin.f32 %v106, %v524
    %v529 = vmin.f32 %v106, %v525
    %v530 = vsub.f32 %v518, %v526
    %v531 = vsub.f32 %v519, %v527
    %v532 = vsub.f32 %v520, %v528
    %v533 = vsub.f32 %v521, %v529
    %v534 = vpack.c.bf16 %v531, %v530
    %v535 = vpack.c.bf16 %v533, %v532
    %536 = vmatprep.subr.bf16.mxu0 0
    %537 = vmatpush1.bf16.msra.mxu0 0
    %538 = vmatprep.subr.bf16.mxu0 0
    %539 = vmatpush1.bf16.msra.mxu0 0
    %540 = vmatprep.subr.bf16.mxu0 0
    %541 = vmatpush1.bf16.msra.mxu0 0
    %542 = vmatprep.subr.bf16.mxu0 0
    %543 = vmatpush1.bf16.msra.mxu0 0
    %544 = vmatprep.subr.bf16.mxu0 0
    %545 = vmatpush1.bf16.msra.mxu0 0
    %546 = vmatprep.subr.bf16.mxu0 0
    %547 = vmatpush1.bf16.msra.mxu0 0
    %548 = vmatprep.subr.bf16.mxu0 0
    %549 = vmatpush1.bf16.msra.mxu0 %v535
    %550 = vmatprep.subr.bf16.mxu0 0
    %551 = vmatpush1.bf16.msra.mxu0 %v534
    %552 = vmatprep.subr.bf16.mxu0 0
    %553 = vmatpush2.bf16.msra.mxu0 0
    %554 = vmatprep.subr.bf16.mxu0 0
    %555 = vmatpush2.bf16.msra.mxu0 0
    %556 = vmatprep.subr.bf16.mxu0 0
    %557 = vmatpush2.bf16.msra.mxu0 0
    %558 = vmatprep.subr.bf16.mxu0 0
    %559 = vmatpush2.bf16.msra.mxu0 0
    %560 = vmatprep.subr.bf16.mxu0 0
    %561 = vmatpush2.bf16.msra.mxu0 0
    %562 = vmatprep.subr.bf16.mxu0 0
    %563 = vmatpush2.bf16.msra.mxu0 0
    %564 = vmatprep.subr.bf16.mxu0 0
    %565 = vmatpush2.bf16.msra.mxu0 0
    %566 = vmatprep.subr.bf16.mxu0 0
    %567 = vmatpush2.bf16.msra.mxu0 0
    %568 = vmatprep.mubr.bf16.mxu0 0
    %569 = vmatmul.mubr.bf16.gmra.mxu0 %v129
    %v570 = vpop.f32.mrf.mxu0
    %v571 = vadd.f32 0.0, %v570
    %v572 = vpop.f32.mrf.mxu0
    %v573 = vpop.f32.mrf.mxu0
    %v574 = vadd.f32 0.0, %v573
    %v575 = vpop.f32.mrf.mxu0
    %576 = vmatprep.mubr.bf16.mxu0 0
    %577 = vmatmul.mubr.bf16.gmra.mxu0 %v132
    %v578 = vpop.f32.mrf.mxu0
    %v579 = vadd.f32 0.0, %v578
    %v580 = vpop.f32.mrf.mxu0
    %v581 = vpop.f32.mrf.mxu0
    %v582 = vadd.f32 0.0, %v581
    %v583 = vpop.f32.mrf.mxu0
    %584 = vdwg.mxu0
    %v585 = vadd.f32 %v86, %v571
    %v586 = vadd.f32 %v89, %v574
    %v587 = vadd.f32 %v94, %v579
    %v588 = vadd.f32 %v97, %v582
    %v589 = vmax.f32 %v101, %v585
    %v590 = vmax.f32 %v101, %v586
    %v591 = vmax.f32 %v101, %v587
    %v592 = vmax.f32 %v101, %v588
    %v593 = vmin.f32 %v106, %v589
    %v594 = vmin.f32 %v106, %v590
    %v595 = vmin.f32 %v106, %v591
    %v596 = vmin.f32 %v106, %v592
    %v597 = vsub.f32 %v585, %v593
    %v598 = vsub.f32 %v586, %v594
    %v599 = vsub.f32 %v587, %v595
    %v600 = vsub.f32 %v588, %v596
    %v601 = vpack.c.bf16 %v598, %v597
    %v602 = vpack.c.bf16 %v600, %v599
    %603 = vmatprep.subr.bf16.mxu0 0
    %604 = vmatpush1.bf16.msra.mxu0 0
    %605 = vmatprep.subr.bf16.mxu0 0
    %606 = vmatpush1.bf16.msra.mxu0 0
    %607 = vmatprep.subr.bf16.mxu0 0
    %608 = vmatpush1.bf16.msra.mxu0 0
    %609 = vmatprep.subr.bf16.mxu0 0
    %610 = vmatpush1.bf16.msra.mxu0 0
    %611 = vmatprep.subr.bf16.mxu0 0
    %612 = vmatpush1.bf16.msra.mxu0 0
    %613 = vmatprep.subr.bf16.mxu0 0
    %614 = vmatpush1.bf16.msra.mxu0 0
    %615 = vmatprep.subr.bf16.mxu0 0
    %616 = vmatpush1.bf16.msra.mxu0 %v602
    %617 = vmatprep.subr.bf16.mxu0 0
    %618 = vmatpush1.bf16.msra.mxu0 %v601
    %619 = vmatprep.subr.bf16.mxu0 0
    %620 = vmatpush2.bf16.msra.mxu0 0
    %621 = vmatprep.subr.bf16.mxu0 0
    %622 = vmatpush2.bf16.msra.mxu0 0
    %623 = vmatprep.subr.bf16.mxu0 0
    %624 = vmatpush2.bf16.msra.mxu0 0
    %625 = vmatprep.subr.bf16.mxu0 0
    %626 = vmatpush2.bf16.msra.mxu0 0
    %627 = vmatprep.subr.bf16.mxu0 0
    %628 = vmatpush2.bf16.msra.mxu0 0
    %629 = vmatprep.subr.bf16.mxu0 0
    %630 = vmatpush2.bf16.msra.mxu0 0
    %631 = vmatprep.subr.bf16.mxu0 0
    %632 = vmatpush2.bf16.msra.mxu0 0
    %633 = vmatprep.subr.bf16.mxu0 0
    %634 = vmatpush2.bf16.msra.mxu0 0
    %635 = vmatprep.mubr.bf16.mxu0 0
    %636 = vmatmul.mubr.bf16.gmra.mxu0 %v129
    %v637 = vpop.f32.mrf.mxu0
    %v638 = vadd.f32 0.0, %v637
    %v639 = vpop.f32.mrf.mxu0
    %v640 = vpop.f32.mrf.mxu0
    %v641 = vadd.f32 0.0, %v640
    %v642 = vpop.f32.mrf.mxu0
    %643 = vmatprep.mubr.bf16.mxu0 0
    %644 = vmatmul.mubr.bf16.gmra.mxu0 %v132
    %v645 = vpop.f32.mrf.mxu0
    %v646 = vadd.f32 0.0, %v645
    %v647 = vpop.f32.mrf.mxu0
    %v648 = vpop.f32.mrf.mxu0
    %v649 = vadd.f32 0.0, %v648
    %v650 = vpop.f32.mrf.mxu0
    %651 = vdwg.mxu0
    %v652 = vadd.f32 %v86, %v638
    %v653 = vadd.f32 %v89, %v641
    %v654 = vadd.f32 %v94, %v646
    %v655 = vadd.f32 %v97, %v649
    %v656 = vmax.f32 %v101, %v652
    %v657 = vmax.f32 %v101, %v653
    %v658 = vmax.f32 %v101, %v654
    %v659 = vmax.f32 %v101, %v655
    %v660 = vmin.f32 %v106, %v656
    %v661 = vmin.f32 %v106, %v657
    %v662 = vmin.f32 %v106, %v658
    %v663 = vmin.f32 %v106, %v659
    %v664 = vsub.f32 %v652, %v660
    %v665 = vsub.f32 %v653, %v661
    %v666 = vsub.f32 %v654, %v662
    %v667 = vsub.f32 %v655, %v663
    %v668 = vpack.c.bf16 %v665, %v664
    %v669 = vpack.c.bf16 %v667, %v666
    %670 = vmatprep.subr.bf16.mxu0 0
    %671 = vmatpush1.bf16.msra.mxu0 0
    %672 = vmatprep.subr.bf16.mxu0 0
    %673 = vmatpush1.bf16.msra.mxu0 0
    %674 = vmatprep.subr.bf16.mxu0 0
    %675 = vmatpush1.bf16.msra.mxu0 0
    %676 = vmatprep.subr.bf16.mxu0 0
    %677 = vmatpush1.bf16.msra.mxu0 0
    %678 = vmatprep.subr.bf16.mxu0 0
    %679 = vmatpush1.bf16.msra.mxu0 0
    %680 = vmatprep.subr.bf16.mxu0 0
    %681 = vmatpush1.bf16.msra.mxu0 0
    %682 = vmatprep.subr.bf16.mxu0 0
    %683 = vmatpush1.bf16.msra.mxu0 %v669
    %684 = vmatprep.subr.bf16.mxu0 0
    %685 = vmatpush1.bf16.msra.mxu0 %v668
    %686 = vmatprep.subr.bf16.mxu0 0
    %687 = vmatpush2.bf16.msra.mxu0 0
    %688 = vmatprep.subr.bf16.mxu0 0
    %689 = vmatpush2.bf16.msra.mxu0 0
    %690 = vmatprep.subr.bf16.mxu0 0
    %691 = vmatpush2.bf16.msra.mxu0 0
    %692 = vmatprep.subr.bf16.mxu0 0
    %693 = vmatpush2.bf16.msra.mxu0 0
    %694 = vmatprep.subr.bf16.mxu0 0
    %695 = vmatpush2.bf16.msra.mxu0 0
    %696 = vmatprep.subr.bf16.mxu0 0
    %697 = vmatpush2.bf16.msra.mxu0 0
    %698 = vmatprep.subr.bf16.mxu0 0
    %699 = vmatpush2.bf16.msra.mxu0 0
    %700 = vmatprep.subr.bf16.mxu0 0
    %701 = vmatpush2.bf16.msra.mxu0 0
    %702 = vmatprep.mubr.bf16.mxu0 0
    %703 = vmatmul.mubr.bf16.gmra.mxu0 %v129
    %v704 = vpop.f32.mrf.mxu0
    %v705 = vadd.f32 0.0, %v704
    %v706 = vpop.f32.mrf.mxu0
    %v707 = vpop.f32.mrf.mxu0
    %v708 = vadd.f32 0.0, %v707
    %v709 = vpop.f32.mrf.mxu0
    %710 = vmatprep.mubr.bf16.mxu0 0
    %711 = vmatmul.mubr.bf16.gmra.mxu0 %v132
    %v712 = vpop.f32.mrf.mxu0
    %v713 = vadd.f32 0.0, %v712
    %v714 = vpop.f32.mrf.mxu0
    %v715 = vpop.f32.mrf.mxu0
    %v716 = vadd.f32 0.0, %v715
    %v717 = vpop.f32.mrf.mxu0
    %718 = vdwg.mxu0
    %v719 = vadd.f32 %v86, %v705
    %v720 = vadd.f32 %v89, %v708
    %v721 = vadd.f32 %v94, %v713
    %v722 = vadd.f32 %v97, %v716
    %v723 = vmax.f32 %v101, %v719
    %v724 = vmax.f32 %v101, %v720
    %v725 = vmax.f32 %v101, %v721
    %v726 = vmax.f32 %v101, %v722
    %v727 = vmin.f32 %v106, %v723
    %v728 = vmin.f32 %v106, %v724
    %v729 = vmin.f32 %v106, %v725
    %v730 = vmin.f32 %v106, %v726
    %v731 = vsub.f32 %v719, %v727
    %v732 = vsub.f32 %v720, %v728
    %v733 = vsub.f32 %v721, %v729
    %v734 = vsub.f32 %v722, %v730
    %v735 = vpack.c.bf16 %v732, %v731
    %v736 = vpack.c.bf16 %v734, %v733
    %737 = vmatprep.subr.bf16.mxu0 0
    %738 = vmatpush1.bf16.msra.mxu0 0
    %739 = vmatprep.subr.bf16.mxu0 0
    %740 = vmatpush1.bf16.msra.mxu0 0
    %741 = vmatprep.subr.bf16.mxu0 0
    %742 = vmatpush1.bf16.msra.mxu0 0
    %743 = vmatprep.subr.bf16.mxu0 0
    %744 = vmatpush1.bf16.msra.mxu0 0
    %745 = vmatprep.subr.bf16.mxu0 0
    %746 = vmatpush1.bf16.msra.mxu0 0
    %747 = vmatprep.subr.bf16.mxu0 0
    %748 = vmatpush1.bf16.msra.mxu0 0
    %749 = vmatprep.subr.bf16.mxu0 0
    %750 = vmatpush1.bf16.msra.mxu0 %v736
    %751 = vmatprep.subr.bf16.mxu0 0
    %752 = vmatpush1.bf16.msra.mxu0 %v735
    %753 = vmatprep.subr.bf16.mxu0 0
    %754 = vmatpush2.bf16.msra.mxu0 0
    %755 = vmatprep.subr.bf16.mxu0 0
    %756 = vmatpush2.bf16.msra.mxu0 0
    %757 = vmatprep.subr.bf16.mxu0 0
    %758 = vmatpush2.bf16.msra.mxu0 0
    %759 = vmatprep.subr.bf16.mxu0 0
    %760 = vmatpush2.bf16.msra.mxu0 0
    %761 = vmatprep.subr.bf16.mxu0 0
    %762 = vmatpush2.bf16.msra.mxu0 0
    %763 = vmatprep.subr.bf16.mxu0 0
    %764 = vmatpush2.bf16.msra.mxu0 0
    %765 = vmatprep.subr.bf16.mxu0 0
    %766 = vmatpush2.bf16.msra.mxu0 0
    %767 = vmatprep.subr.bf16.mxu0 0
    %768 = vmatpush2.bf16.msra.mxu0 0
    %769 = vmatprep.mubr.bf16.mxu0 0
    %770 = vmatmul.mubr.bf16.gmra.mxu0 %v129
    %v771 = vpop.f32.mrf.mxu0
    %v772 = vadd.f32 0.0, %v771
    %v773 = vpop.f32.mrf.mxu0
    %v774 = vpop.f32.mrf.mxu0
    %v775 = vadd.f32 0.0, %v774
    %v776 = vpop.f32.mrf.mxu0
    %777 = vmatprep.mubr.bf16.mxu0 0
    %778 = vmatmul.mubr.bf16.gmra.mxu0 %v132
    %v779 = vpop.f32.mrf.mxu0
    %v780 = vadd.f32 0.0, %v779
    %v781 = vpop.f32.mrf.mxu0
    %v782 = vpop.f32.mrf.mxu0
    %v783 = vadd.f32 0.0, %v782
    %v784 = vpop.f32.mrf.mxu0
    %785 = vdwg.mxu0
    %v786 = vadd.f32 %v86, %v772
    %v787 = vadd.f32 %v89, %v775
    %v788 = vadd.f32 %v94, %v780
    %v789 = vadd.f32 %v97, %v783
    %v790 = vmax.f32 %v101, %v786
    %v791 = vmax.f32 %v101, %v787
    %v792 = vmax.f32 %v101, %v788
    %v793 = vmax.f32 %v101, %v789
    %v794 = vmin.f32 %v106, %v790
    %v795 = vmin.f32 %v106, %v791
    %v796 = vmin.f32 %v106, %v792
    %v797 = vmin.f32 %v106, %v793
    %v798 = vsub.f32 %v786, %v794
    %v799 = vsub.f32 %v787, %v795
    %v800 = vsub.f32 %v788, %v796
    %v801 = vsub.f32 %v789, %v797
    %v802 = vpack.c.bf16 %v799, %v798
    %v803 = vpack.c.bf16 %v801, %v800
    %804 = vmatprep.subr.bf16.mxu0 0
    %805 = vmatpush1.bf16.msra.mxu0 0
    %806 = vmatprep.subr.bf16.mxu0 0
    %807 = vmatpush1.bf16.msra.mxu0 0
    %808 = vmatprep.subr.bf16.mxu0 0
    %809 = vmatpush1.bf16.msra.mxu0 0
    %810 = vmatprep.subr.bf16.mxu0 0
    %811 = vmatpush1.bf16.msra.mxu0 0
    %812 = vmatprep.subr.bf16.mxu0 0
    %813 = vmatpush1.bf16.msra.mxu0 0
    %814 = vmatprep.subr.bf16.mxu0 0
    %815 = vmatpush1.bf16.msra.mxu0 0
    %816 = vmatprep.subr.bf16.mxu0 0
    %817 = vmatpush1.bf16.msra.mxu0 %v803
    %818 = vmatprep.subr.bf16.mxu0 0
    %819 = vmatpush1.bf16.msra.mxu0 %v802
    %820 = vmatprep.subr.bf16.mxu0 0
    %821 = vmatpush2.bf16.msra.mxu0 0
    %822 = vmatprep.subr.bf16.mxu0 0
    %823 = vmatpush2.bf16.msra.mxu0 0
    %824 = vmatprep.subr.bf16.mxu0 0
    %825 = vmatpush2.bf16.msra.mxu0 0
    %826 = vmatprep.subr.bf16.mxu0 0
    %827 = vmatpush2.bf16.msra.mxu0 0
    %828 = vmatprep.subr.bf16.mxu0 0
    %829 = vmatpush2.bf16.msra.mxu0 0
    %830 = vmatprep.subr.bf16.mxu0 0
    %831 = vmatpush2.bf16.msra.mxu0 0
    %832 = vmatprep.subr.bf16.mxu0 0
    %833 = vmatpush2.bf16.msra.mxu0 0
    %834 = vmatprep.subr.bf16.mxu0 0
    %835 = vmatpush2.bf16.msra.mxu0 0
    %836 = vmatprep.mubr.bf16.mxu0 0
    %837 = vmatmul.mubr.bf16.gmra.mxu0 %v129
    %v838 = vpop.f32.mrf.mxu0
    %v839 = vadd.f32 0.0, %v838
    %v840 = vpop.f32.mrf.mxu0
    %v841 = vpop.f32.mrf.mxu0
    %v842 = vadd.f32 0.0, %v841
    %v843 = vpop.f32.mrf.mxu0
    %844 = vmatprep.mubr.bf16.mxu0 0
    %845 = vmatmul.mubr.bf16.gmra.mxu0 %v132
    %v846 = vpop.f32.mrf.mxu0
    %v847 = vadd.f32 0.0, %v846
    %v848 = vpop.f32.mrf.mxu0
    %v849 = vpop.f32.mrf.mxu0
    %v850 = vadd.f32 0.0, %v849
    %v851 = vpop.f32.mrf.mxu0
    %852 = vdwg.mxu0
    %v853 = vadd.f32 %v86, %v839
    %v854 = vadd.f32 %v89, %v842
    %v855 = vadd.f32 %v94, %v847
    %v856 = vadd.f32 %v97, %v850
    %v857 = vmax.f32 %v101, %v853
    %v858 = vmax.f32 %v101, %v854
    %v859 = vmax.f32 %v101, %v855
    %v860 = vmax.f32 %v101, %v856
    %v861 = vmin.f32 %v106, %v857
    %v862 = vmin.f32 %v106, %v858
    %v863 = vmin.f32 %v106, %v859
    %v864 = vmin.f32 %v106, %v860
    %v865 = vsub.f32 %v853, %v861
    %v866 = vsub.f32 %v854, %v862
    %v867 = vsub.f32 %v855, %v863
    %v868 = vsub.f32 %v856, %v864
    %v869 = vpack.c.bf16 %v866, %v865
    %v870 = vpack.c.bf16 %v868, %v867
    %871 = vmatprep.subr.bf16.mxu0 0
    %872 = vmatpush1.bf16.msra.mxu0 0
    %873 = vmatprep.subr.bf16.mxu0 0
    %874 = vmatpush1.bf16.msra.mxu0 0
    %875 = vmatprep.subr.bf16.mxu0 0
    %876 = vmatpush1.bf16.msra.mxu0 0
    %877 = vmatprep.subr.bf16.mxu0 0
    %878 = vmatpush1.bf16.msra.mxu0 0
    %879 = vmatprep.subr.bf16.mxu0 0
    %880 = vmatpush1.bf16.msra.mxu0 0
    %881 = vmatprep.subr.bf16.mxu0 0
    %882 = vmatpush1.bf16.msra.mxu0 0
    %883 = vmatprep.subr.bf16.mxu0 0
    %884 = vmatpush1.bf16.msra.mxu0 %v870
    %885 = vmatprep.subr.bf16.mxu0 0
    %886 = vmatpush1.bf16.msra.mxu0 %v869
    %887 = vmatprep.subr.bf16.mxu0 0
    %888 = vmatpush2.bf16.msra.mxu0 0
    %889 = vmatprep.subr.bf16.mxu0 0
    %890 = vmatpush2.bf16.msra.mxu0 0
    %891 = vmatprep.subr.bf16.mxu0 0
    %892 = vmatpush2.bf16.msra.mxu0 0
    %893 = vmatprep.subr.bf16.mxu0 0
    %894 = vmatpush2.bf16.msra.mxu0 0
    %895 = vmatprep.subr.bf16.mxu0 0
    %896 = vmatpush2.bf16.msra.mxu0 0
    %897 = vmatprep.subr.bf16.mxu0 0
    %898 = vmatpush2.bf16.msra.mxu0 0
    %899 = vmatprep.subr.bf16.mxu0 0
    %900 = vmatpush2.bf16.msra.mxu0 0
    %901 = vmatprep.subr.bf16.mxu0 0
    %902 = vmatpush2.bf16.msra.mxu0 0
    %903 = vmatprep.mubr.bf16.mxu0 0
    %904 = vmatmul.mubr.bf16.gmra.mxu0 %v129
    %v905 = vpop.f32.mrf.mxu0
    %v906 = vadd.f32 0.0, %v905
    %v907 = vpop.f32.mrf.mxu0
    %v908 = vpop.f32.mrf.mxu0
    %v909 = vadd.f32 0.0, %v908
    %v910 = vpop.f32.mrf.mxu0
    %911 = vmatprep.mubr.bf16.mxu0 0
    %912 = vmatmul.mubr.bf16.gmra.mxu0 %v132
    %v913 = vpop.f32.mrf.mxu0
    %v914 = vadd.f32 0.0, %v913
    %v915 = vpop.f32.mrf.mxu0
    %v916 = vpop.f32.mrf.mxu0
    %v917 = vadd.f32 0.0, %v916
    %v918 = vpop.f32.mrf.mxu0
    %919 = vdwg.mxu0
    %v920 = vadd.f32 %v86, %v906
    %v921 = vadd.f32 %v89, %v909
    %v922 = vadd.f32 %v94, %v914
    %v923 = vadd.f32 %v97, %v917
    %v924 = vmax.f32 %v101, %v920
    %v925 = vmax.f32 %v101, %v921
    %v926 = vmax.f32 %v101, %v922
    %v927 = vmax.f32 %v101, %v923
    %v928 = vmin.f32 %v106, %v924
    %v929 = vmin.f32 %v106, %v925
    %v930 = vmin.f32 %v106, %v926
    %v931 = vmin.f32 %v106, %v927
    %v932 = vsub.f32 %v920, %v928
    %v933 = vsub.f32 %v921, %v929
    %v934 = vsub.f32 %v922, %v930
    %v935 = vsub.f32 %v923, %v931
    %v936 = vpack.c.bf16 %v933, %v932
    %v937 = vpack.c.bf16 %v935, %v934
    %938 = vmatprep.subr.bf16.mxu0 0
    %939 = vmatpush1.bf16.msra.mxu0 0
    %940 = vmatprep.subr.bf16.mxu0 0
    %941 = vmatpush1.bf16.msra.mxu0 0
    %942 = vmatprep.subr.bf16.mxu0 0
    %943 = vmatpush1.bf16.msra.mxu0 0
    %944 = vmatprep.subr.bf16.mxu0 0
    %945 = vmatpush1.bf16.msra.mxu0 0
    %946 = vmatprep.subr.bf16.mxu0 0
    %947 = vmatpush1.bf16.msra.mxu0 0
    %948 = vmatprep.subr.bf16.mxu0 0
    %949 = vmatpush1.bf16.msra.mxu0 0
    %950 = vmatprep.subr.bf16.mxu0 0
    %951 = vmatpush1.bf16.msra.mxu0 %v937
    %952 = vmatprep.subr.bf16.mxu0 0
    %953 = vmatpush1.bf16.msra.mxu0 %v936
    %954 = vmatprep.subr.bf16.mxu0 0
    %955 = vmatpush2.bf16.msra.mxu0 0
    %956 = vmatprep.subr.bf16.mxu0 0
    %957 = vmatpush2.bf16.msra.mxu0 0
    %958 = vmatprep.subr.bf16.mxu0 0
    %959 = vmatpush2.bf16.msra.mxu0 0
    %960 = vmatprep.subr.bf16.mxu0 0
    %961 = vmatpush2.bf16.msra.mxu0 0
    %962 = vmatprep.subr.bf16.mxu0 0
    %963 = vmatpush2.bf16.msra.mxu0 0
    %964 = vmatprep.subr.bf16.mxu0 0
    %965 = vmatpush2.bf16.msra.mxu0 0
    %966 = vmatprep.subr.bf16.mxu0 0
    %967 = vmatpush2.bf16.msra.mxu0 0
    %968 = vmatprep.subr.bf16.mxu0 0
    %969 = vmatpush2.bf16.msra.mxu0 0
    %970 = vmatprep.mubr.bf16.mxu0 0
    %971 = vmatmul.mubr.bf16.gmra.mxu0 %v129
    %v972 = vpop.f32.mrf.mxu0
    %v973 = vadd.f32 0.0, %v972
    %v974 = vpop.f32.mrf.mxu0
    %v975 = vpop.f32.mrf.mxu0
    %v976 = vadd.f32 0.0, %v975
    %v977 = vpop.f32.mrf.mxu0
    %978 = vmatprep.mubr.bf16.mxu0 0
    %979 = vmatmul.mubr.bf16.gmra.mxu0 %v132
    %v980 = vpop.f32.mrf.mxu0
    %v981 = vadd.f32 0.0, %v980
    %v982 = vpop.f32.mrf.mxu0
    %v983 = vpop.f32.mrf.mxu0
    %v984 = vadd.f32 0.0, %v983
    %v985 = vpop.f32.mrf.mxu0
    %986 = vdwg.mxu0
    %v987 = vadd.f32 %v86, %v973
    %v988 = vadd.f32 %v89, %v976
    %v989 = vadd.f32 %v94, %v981
    %v990 = vadd.f32 %v97, %v984
    %v991 = vmax.f32 %v101, %v987
    %v992 = vmax.f32 %v101, %v988
    %v993 = vmax.f32 %v101, %v989
    %v994 = vmax.f32 %v101, %v990
    %v995 = vmin.f32 %v106, %v991
    %v996 = vmin.f32 %v106, %v992
    %v997 = vmin.f32 %v106, %v993
    %v998 = vmin.f32 %v106, %v994
    %v999 = vsub.f32 %v987, %v995
    %v1000 = vsub.f32 %v988, %v996
    %v1001 = vsub.f32 %v989, %v997
    %v1002 = vsub.f32 %v990, %v998
    %v1003 = vpack.c.bf16 %v1000, %v999
    %v1004 = vpack.c.bf16 %v1002, %v1001
    %1005 = vmatprep.subr.bf16.mxu0 0
    %1006 = vmatpush1.bf16.msra.mxu0 0
    %1007 = vmatprep.subr.bf16.mxu0 0
    %1008 = vmatpush1.bf16.msra.mxu0 0
    %1009 = vmatprep.subr.bf16.mxu0 0
    %1010 = vmatpush1.bf16.msra.mxu0 0
    %1011 = vmatprep.subr.bf16.mxu0 0
    %1012 = vmatpush1.bf16.msra.mxu0 0
    %1013 = vmatprep.subr.bf16.mxu0 0
    %1014 = vmatpush1.bf16.msra.mxu0 0
    %1015 = vmatprep.subr.bf16.mxu0 0
    %1016 = vmatpush1.bf16.msra.mxu0 0
    %1017 = vmatprep.subr.bf16.mxu0 0
    %1018 = vmatpush1.bf16.msra.mxu0 %v1004
    %1019 = vmatprep.subr.bf16.mxu0 0
    %1020 = vmatpush1.bf16.msra.mxu0 %v1003
    %1021 = vmatprep.subr.bf16.mxu0 0
    %1022 = vmatpush2.bf16.msra.mxu0 0
    %1023 = vmatprep.subr.bf16.mxu0 0
    %1024 = vmatpush2.bf16.msra.mxu0 0
    %1025 = vmatprep.subr.bf16.mxu0 0
    %1026 = vmatpush2.bf16.msra.mxu0 0
    %1027 = vmatprep.subr.bf16.mxu0 0
    %1028 = vmatpush2.bf16.msra.mxu0 0
    %1029 = vmatprep.subr.bf16.mxu0 0
    %1030 = vmatpush2.bf16.msra.mxu0 0
    %1031 = vmatprep.subr.bf16.mxu0 0
    %1032 = vmatpush2.bf16.msra.mxu0 0
    %1033 = vmatprep.subr.bf16.mxu0 0
    %1034 = vmatpush2.bf16.msra.mxu0 0
    %1035 = vmatprep.subr.bf16.mxu0 0
    %1036 = vmatpush2.bf16.msra.mxu0 0
    %1037 = vmatprep.mubr.bf16.mxu0 0
    %1038 = vmatmul.mubr.bf16.gmra.mxu0 %v129
    %v1039 = vpop.f32.mrf.mxu0
    %v1040 = vadd.f32 0.0, %v1039
    %v1041 = vpop.f32.mrf.mxu0
    %v1042 = vpop.f32.mrf.mxu0
    %v1043 = vadd.f32 0.0, %v1042
    %v1044 = vpop.f32.mrf.mxu0
    %1045 = vmatprep.mubr.bf16.mxu0 0
    %1046 = vmatmul.mubr.bf16.gmra.mxu0 %v132
    %v1047 = vpop.f32.mrf.mxu0
    %v1048 = vadd.f32 0.0, %v1047
    %v1049 = vpop.f32.mrf.mxu0
    %v1050 = vpop.f32.mrf.mxu0
    %v1051 = vadd.f32 0.0, %v1050
    %v1052 = vpop.f32.mrf.mxu0
    %1053 = vdwg.mxu0
    %v1054 = vadd.f32 %v86, %v1040
    %v1055 = vadd.f32 %v89, %v1043
    %v1056 = vadd.f32 %v94, %v1048
    %v1057 = vadd.f32 %v97, %v1051
    %v1058 = vmax.f32 %v101, %v1054
    %v1059 = vmax.f32 %v101, %v1055
    %v1060 = vmax.f32 %v101, %v1056
    %v1061 = vmax.f32 %v101, %v1057
    %v1062 = vmin.f32 %v106, %v1058
    %v1063 = vmin.f32 %v106, %v1059
    %v1064 = vmin.f32 %v106, %v1060
    %v1065 = vmin.f32 %v106, %v1061
    %v1066 = vsub.f32 %v1054, %v1062
    %v1067 = vsub.f32 %v1055, %v1063
    %v1068 = vsub.f32 %v1056, %v1064
    %v1069 = vsub.f32 %v1057, %v1065
    %v1070 = vpack.c.bf16 %v1067, %v1066
    %v1071 = vpack.c.bf16 %v1069, %v1068
    %1072 = vmatprep.subr.bf16.mxu0 0
    %1073 = vmatpush1.bf16.msra.mxu0 0
    %1074 = vmatprep.subr.bf16.mxu0 0
    %1075 = vmatpush1.bf16.msra.mxu0 0
    %1076 = vmatprep.subr.bf16.mxu0 0
    %1077 = vmatpush1.bf16.msra.mxu0 0
    %1078 = vmatprep.subr.bf16.mxu0 0
    %1079 = vmatpush1.bf16.msra.mxu0 0
    %1080 = vmatprep.subr.bf16.mxu0 0
    %1081 = vmatpush1.bf16.msra.mxu0 0
    %1082 = vmatprep.subr.bf16.mxu0 0
    %1083 = vmatpush1.bf16.msra.mxu0 0
    %1084 = vmatprep.subr.bf16.mxu0 0
    %1085 = vmatpush1.bf16.msra.mxu0 %v1071
    %1086 = vmatprep.subr.bf16.mxu0 0
    %1087 = vmatpush1.bf16.msra.mxu0 %v1070
    %1088 = vmatprep.subr.bf16.mxu0 0
    %1089 = vmatpush2.bf16.msra.mxu0 0
    %1090 = vmatprep.subr.bf16.mxu0 0
    %1091 = vmatpush2.bf16.msra.mxu0 0
    %1092 = vmatprep.subr.bf16.mxu0 0
    %1093 = vmatpush2.bf16.msra.mxu0 0
    %1094 = vmatprep.subr.bf16.mxu0 0
    %1095 = vmatpush2.bf16.msra.mxu0 0
    %1096 = vmatprep.subr.bf16.mxu0 0
    %1097 = vmatpush2.bf16.msra.mxu0 0
    %1098 = vmatprep.subr.bf16.mxu0 0
    %1099 = vmatpush2.bf16.msra.mxu0 0
    %1100 = vmatprep.subr.bf16.mxu0 0
    %1101 = vmatpush2.bf16.msra.mxu0 0
    %1102 = vmatprep.subr.bf16.mxu0 0
    %1103 = vmatpush2.bf16.msra.mxu0 0
    %1104 = vmatprep.mubr.bf16.mxu0 0
    %1105 = vmatmul.mubr.bf16.gmra.mxu0 %v129
    %v1106 = vpop.f32.mrf.mxu0
    %v1107 = vadd.f32 0.0, %v1106
    %v1108 = vpop.f32.mrf.mxu0
    %v1109 = vpop.f32.mrf.mxu0
    %v1110 = vadd.f32 0.0, %v1109
    %v1111 = vpop.f32.mrf.mxu0
    %1112 = vmatprep.mubr.bf16.mxu0 0
    %1113 = vmatmul.mubr.bf16.gmra.mxu0 %v132
    %v1114 = vpop.f32.mrf.mxu0
    %v1115 = vadd.f32 0.0, %v1114
    %v1116 = vpop.f32.mrf.mxu0
    %v1117 = vpop.f32.mrf.mxu0
    %v1118 = vadd.f32 0.0, %v1117
    %v1119 = vpop.f32.mrf.mxu0
    %1120 = vdwg.mxu0
    %v1121 = vadd.f32 %v86, %v1107
    %v1122 = vadd.f32 %v89, %v1110
    %v1123 = vadd.f32 %v94, %v1115
    %v1124 = vadd.f32 %v97, %v1118
    %v1125 = vmax.f32 %v101, %v1121
    %v1126 = vmax.f32 %v101, %v1122
    %v1127 = vmax.f32 %v101, %v1123
    %v1128 = vmax.f32 %v101, %v1124
    %v1129 = vmin.f32 %v106, %v1125
    %v1130 = vmin.f32 %v106, %v1126
    %v1131 = vmin.f32 %v106, %v1127
    %v1132 = vmin.f32 %v106, %v1128
    %v1133 = vsub.f32 %v1121, %v1129
    %v1134 = vsub.f32 %v1122, %v1130
    %v1135 = vsub.f32 %v1123, %v1131
    %v1136 = vsub.f32 %v1124, %v1132
    %1137 = vst [vmem:[#allocation3] sm:$0xff] %v1133
    %1138 = vst [vmem:[#allocation3 + $0x8] sm:$0xff] %v1134
    %1139 = vst [vmem:[#allocation3 + $0x10] sm:$0xff] %v1135
    %1140 = vst [vmem:[#allocation3 + $0x18] sm:$0xff] %v1136
    // Predicated region
    $region18: #{tpu_custom_call.1} parent=1 // pred_check
      _
    $region19: #{tpu_custom_call.1} parent=1 // pred_check_branch
      %1142 = sbr.rel (0) target = $region21
    $region20: #{tpu_custom_call.1} parent=1 // pred_region
      %s1144 = ssub.s32 512, 512
      %1145 = vsyncadd [#allocation4], %s1144
      %s1146 = sshll.u32 [#allocation3], 4
      %s1147 = int_to_ptr.vmem [resolvable:$true] %s1146
      %1152 = dma.vmem_to_hbm [thread:$0]  %s1147, 512, %s4, [#allocation4], 128, 128, 8
    $region21: #{tpu_custom_call.1} parent=1 // pred_fallthru
      _
    // Predicated region
    $region22: #{tpu_custom_call.1} parent=1 // pred_check
      _
    $region23: #{tpu_custom_call.1} parent=1 // pred_check_branch
      %1154 = sbr.rel (0) target = $region25
    $region24: #{tpu_custom_call.1} parent=1 // pred_region
      %1155 = dma.done [#allocation4], 512
    $region25: #{tpu_custom_call.1} parent=1 // pred_fallthru
      _
    %1156 = vsyncpa [#allocation4], 1

</llo_original>
